<compile_context>
chip_gen: v7x
topology: tpu7x:2x2x1
jax: 0.10.0
libtpu: 0.0.40
codegen_flags: <defaults>
</compile_context>

<pallas_src>
import math

import jax
import jax.numpy as jnp
from jax.experimental import pallas as pl
from jax.experimental.pallas import tpu as pltpu


def _round_up(n: int, m: int) -> int:
    return ((n + m - 1) // m) * m


def _norm_linear_kernel(x_ref, w_ref, inv_x_ref, inv_w_ref, o_ref, acc_ref):
    k = pl.program_id(2)

    @pl.when(k == 0)
    def _init():
        acc_ref[...] = jnp.zeros_like(acc_ref)

    # NT-form matmul on the raw operands, f32 accumulation on the MXU.
    acc_ref[...] += jax.lax.dot_general(
        x_ref[...], w_ref[...],
        dimension_numbers=(((1,), (1,)), ((), ())),
        preferred_element_type=jnp.float32)

    @pl.when(k == pl.num_programs(2) - 1)
    def _finalize():
        # cosine = (x @ w.T) * inv||x|| * inv||w||   (== normalize-then-matmul)
        o_ref[...] = (acc_ref[...] * inv_x_ref[...] * inv_w_ref[...]).astype(o_ref.dtype)


def _vmem_budget():
    """Returns (vmem_limit_bytes or None, tile budget in bytes)."""
    cap = None
    try:
        info = pltpu.get_tpu_info()
        cap = getattr(info, "vmem_capacity_bytes", None)
    except Exception:
        cap = None
    if cap:
        return int(cap * 0.8), int(cap * 0.7)
    # Unknown chip: leave the compiler's default scoped limit alone and budget
    # the tiles against a conservative 32 MiB.
    return None, 32 * 1024 * 1024


def _choose_tiles(B, OUT, IN, in_itemsize, out_itemsize, budget,
                  block_m, block_n, block_k):
    tm = min(block_m, _round_up(B, 8))          # sublane axis of x / out
    tn = min(block_n, _round_up(OUT, 128))      # lane axis of out (lane-dense)
    tk = IN if IN <= block_k else _round_up(block_k, 128)

    def need(tm_, tn_, tk_):
        return (2 * (tm_ + tn_) * tk_ * in_itemsize   # double-buffered x / w tiles
                + 2 * tm_ * tn_ * out_itemsize        # double-buffered out tile
                + tm_ * tn_ * 4                       # f32 accumulator scratch
                + 4 * (tm_ + tn_) * 4)                # inv_x / inv_w tiles

    # Shrink to fit the VMEM budget: reduction tile first, then tn, then tm.
    while need(tm, tn, tk) > budget:
        if tk > 512:
            tk = max(512, _round_up(tk // 2, 128))
        elif tn > 128:
            tn = max(128, _round_up(tn // 2, 128))
        elif tm > 8:
            tm = max(8, _round_up(tm // 2, 8))
        else:
            break
    return tm, tn, tk


def norm_linear(x, weight, *, block_m=256, block_n=512, block_k=2048):
    """Pallas implementation of NormLinear.forward.

    x:      (batch, in_features)
    weight: (out_features, in_features)
    returns (batch, out_features), dtype of x.

    Defaults (tm=256, tn=512) are a good middle ground for v5e/v6e/v7x; on v6e
    with bf16 weights, pass block_n=768..1024 to approach the MXU roofline.
    """
    B, IN = x.shape
    OUT, IN_w = weight.shape
    assert IN == IN_w, "in_features mismatch"
    out_dtype = x.dtype

    vmem_limit, budget = _vmem_budget()
    tm, tn, tk = _choose_tiles(B, OUT, IN, x.dtype.itemsize, x.dtype.itemsize,
                               budget, block_m, block_n, block_k)

    # ---- Norm hoist (reduction hoist, NOT a full-tensor pre-scale): one
    # streaming pass over x and w producing tiny (B,1)/(1,OUT) factors, vs the
    # grid's many repeated reads of the same tiles inside the kernel.
    eps2 = jnp.float32(1e-24)                              # (1e-12)^2, matches F.normalize eps
    xf = x.astype(jnp.float32)
    wf = weight.astype(jnp.float32)
    inv_x = jax.lax.rsqrt(
        jnp.maximum(jnp.sum(xf * xf, axis=-1, keepdims=True), eps2))        # (B, 1)
    inv_w = jax.lax.rsqrt(
        jnp.maximum(jnp.sum(wf * wf, axis=-1, keepdims=True), eps2)).T      # (1, OUT)

    # ---- Padding to tile multiples (zero rows/cols are exactly zeroed in the
    # output by inv factors of 0 on the padded side and are sliced away below).
    Bp = _round_up(B, tm)
    OUTp = _round_up(OUT, tn)
    INp = _round_up(IN, tk)
    if Bp != B or INp != IN:
        x = jnp.pad(x, ((0, Bp - B), (0, INp - IN)))
    if OUTp != OUT or INp != IN:
        weight = jnp.pad(weight, ((0, OUTp - OUT), (0, INp - IN)))
    if Bp != B:
        inv_x = jnp.pad(inv_x, ((0, Bp - B), (0, 0)))
    if OUTp != OUT:
        inv_w = jnp.pad(inv_w, ((0, 0), (0, OUTp - OUT)))

    # Grid: j (weight tiles, outermost -> megacore splits W traffic),
    #       i (batch tiles), k (reduction, innermost, "arbitrary").
    grid = (OUTp // tn, Bp // tm, INp // tk)

    cp_kwargs = dict(dimension_semantics=("parallel", "parallel", "arbitrary"))
    if vmem_limit is not None:
        cp_kwargs["vmem_limit_bytes"] = vmem_limit

    out = pl.pallas_call(
        _norm_linear_kernel,
        out_shape=jax.ShapeDtypeStruct((Bp, OUTp), out_dtype),
        grid_spec=pltpu.PrefetchScalarGridSpec(
            num_scalar_prefetch=0,
            grid=grid,
            in_specs=[
                pl.BlockSpec((tm, tk), lambda j, i, k: (i, k)),   # x tile
                pl.BlockSpec((tn, tk), lambda j, i, k: (j, k)),   # w tile
                pl.BlockSpec((tm, 1), lambda j, i, k: (i, 0)),    # inv_x
                pl.BlockSpec((1, tn), lambda j, i, k: (0, j)),    # inv_w (lane-major)
            ],
            out_specs=pl.BlockSpec((tm, tn), lambda j, i, k: (i, j)),
            scratch_shapes=[pltpu.VMEM((tm, tn), jnp.float32)],
        ),
        compiler_params=pltpu.CompilerParams(**cp_kwargs),
    )(x, weight, inv_x, inv_w)

    if Bp != B or OUTp != OUT:
        out = out[:B, :OUT]
    return out


def _reference(x, weight):
    # Pure-JAX reference mirroring the PyTorch forward (F.normalize semantics).
    eps = 1e-12
    x_n = x / jnp.maximum(jnp.linalg.norm(x, axis=-1, keepdims=True), eps)
    w_n = weight / jnp.maximum(jnp.linalg.norm(weight, axis=-1, keepdims=True), eps)
    return x_n @ w_n.T


def _run_case(key, batch, in_features, out_features, dtype,
              block_m, block_n, block_k, atol):
    k_x, k_w = jax.random.split(key)
    # Deterministic kaiming_uniform_(a=sqrt(5)) init: bound = 1/sqrt(fan_in).
    bound = 1.0 / math.sqrt(in_features)
    weight = jax.random.uniform(
        k_w, (out_features, in_features), dtype=jnp.float32,
        minval=-bound, maxval=bound).astype(dtype)
    x = jax.random.normal(k_x, (batch, in_features), dtype=jnp.float32).astype(dtype)

    out = jax.block_until_ready(
        norm_linear(x, weight, block_m=block_m, block_n=block_n, block_k=block_k))
    ref = _reference(x.astype(jnp.float32), weight.astype(jnp.float32))

    assert out.shape == (batch, out_features), f"bad shape {out.shape}"
    err = float(jnp.max(jnp.abs(out.astype(jnp.float32) - ref)))
    assert err <= atol, (
        f"mismatch vs reference (dtype={dtype}, shape=({batch},{in_features},"
        f"{out_features})), max err={err}")


if __name__ == "__main__":
    key = jax.random.PRNGKey(0)
    k1, k2, k3 = jax.random.split(key, 3)

    # 1) Demo-scale: single tile, OUT padded to a lane-dense 128, single k step
    #    (weight tile reused across the inner batch axis without re-DMA).
    _run_case(k1, batch=8, in_features=32, out_features=16,
              dtype=jnp.float32, block_m=256, block_n=512, block_k=2048, atol=2e-5)

    # 2) Multi-tile grid incl. K-tiling and OUT padding: grid = (2, 3, 2),
    #    exercises pl.when init/finalize on the f32 accumulator scratch.
    _run_case(k2, batch=48, in_features=256, out_features=160,
              dtype=jnp.float32, block_m=16, block_n=128, block_k=128, atol=2e-5)

    # 3) bf16 operands feed the MXU natively; accumulation/scaling stay f32.
    _run_case(k3, batch=16, in_features=128, out_features=128,
              dtype=jnp.bfloat16, block_m=256, block_n=512, block_k=2048, atol=2e-2)

    print("KERNEL_OK")
</pallas_src>

<mosaic_0001>
module attributes {stable_mosaic.version = 11 : i64} {
  func.func @_norm_linear_kernel(%arg0: i32, %arg1: i32, %arg2: i32, %arg3: memref<8x32xf32, #tpu.memory_space<vmem>>, %arg4: memref<128x32xf32, #tpu.memory_space<vmem>>, %arg5: memref<8x1xf32, #tpu.memory_space<vmem>>, %arg6: memref<1x128xf32, #tpu.memory_space<vmem>>, %arg7: memref<8x128xf32, #tpu.memory_space<vmem>>, %arg8: memref<8x128xf32, #tpu.memory_space<vmem>>) attributes {dimension_semantics = [#tpu.dimension_semantics<parallel>, #tpu.dimension_semantics<parallel>, #tpu.dimension_semantics<arbitrary>], iteration_bounds = array<i64: 1, 1, 1>, scalar_prefetch = 0 : i64, scratch_operands = 1 : i64, tpu.core_type = #tpu.core_type<tc>, window_params = [{transform_indices = @transform_0, window_bounds = array<i64: 8, 32>}, {transform_indices = @transform_1, window_bounds = array<i64: 128, 32>}, {transform_indices = @transform_2, window_bounds = array<i64: 8, 1>}, {transform_indices = @transform_3, window_bounds = array<i64: 1, 128>}, {transform_indices = @transform_4, window_bounds = array<i64: 8, 128>}]} {
    %c0_i32 = arith.constant 0 : i32
    %0 = arith.cmpi eq, %arg2, %c0_i32 : i32
    %1 = arith.extui %0 : i1 to i32
    %c0_i32_0 = arith.constant 0 : i32
    %2 = arith.cmpi ne, %1, %c0_i32_0 : i32
    scf.if %2 {
      %cst_10 = arith.constant 0.000000e+00 : f32
      %12 = vector.broadcast %cst_10 : f32 to vector<8x128xf32>
      %c0_11 = arith.constant 0 : index
      %c0_12 = arith.constant 0 : index
      %13 = vector.load %arg8[%c0_11, %c0_12] : memref<8x128xf32, #tpu.memory_space<vmem>>, vector<8x128xf32>
      tpu.vector_store %arg8[%c0_11, %c0_12], %12 {strides = array<i32>} : memref<8x128xf32, #tpu.memory_space<vmem>>, vector<8x128xf32>,
    } else {
    }
    %c0 = arith.constant 0 : index
    %c0_1 = arith.constant 0 : index
    %3 = vector.load %arg8[%c0, %c0_1] : memref<8x128xf32, #tpu.memory_space<vmem>>, vector<8x128xf32>
    %c0_2 = arith.constant 0 : index
    %c0_3 = arith.constant 0 : index
    %4 = vector.load %arg3[%c0_2, %c0_3] : memref<8x32xf32, #tpu.memory_space<vmem>>, vector<8x32xf32>
    %c0_4 = arith.constant 0 : index
    %c0_5 = arith.constant 0 : index
    %5 = vector.load %arg4[%c0_4, %c0_5] : memref<128x32xf32, #tpu.memory_space<vmem>>, vector<128x32xf32>
    %cst = arith.constant dense<0.000000e+00> : vector<8x128xf32>
    %6 = tpu.matmul %4, %5, %cst {dimension_numbers = #tpu.dot_dimension_numbers<[1], [1], [0], [0], [0, 0, 1, 0], [], []>} : vector<8x32xf32>, vector<128x32xf32>, vector<8x128xf32> -> vector<8x128xf32>
    %7 = arith.addf %3, %6 : vector<8x128xf32>
    %c0_6 = arith.constant 0 : index
    %c0_7 = arith.constant 0 : index
    %8 = vector.load %arg8[%c0_6, %c0_7] : memref<8x128xf32, #tpu.memory_space<vmem>>, vector<8x128xf32>
    tpu.vector_store %arg8[%c0_6, %c0_7], %7 {strides = array<i32>} : memref<8x128xf32, #tpu.memory_space<vmem>>, vector<8x128xf32>,
    %c0_i32_8 = arith.constant 0 : i32
    %9 = arith.cmpi eq, %arg2, %c0_i32_8 : i32
    %10 = arith.extui %9 : i1 to i32
    %c0_i32_9 = arith.constant 0 : i32
    %11 = arith.cmpi ne, %10, %c0_i32_9 : i32
    scf.if %11 {
      %c0_10 = arith.constant 0 : index
      %c0_11 = arith.constant 0 : index
      %12 = vector.load %arg8[%c0_10, %c0_11] : memref<8x128xf32, #tpu.memory_space<vmem>>, vector<8x128xf32>
      %c0_12 = arith.constant 0 : index
      %c0_13 = arith.constant 0 : index
      %13 = vector.load %arg5[%c0_12, %c0_13] : memref<8x1xf32, #tpu.memory_space<vmem>>, vector<8x1xf32>
      %14 = vector.broadcast %13 : vector<8x1xf32> to vector<8x128xf32>
      %15 = arith.mulf %12, %14 : vector<8x128xf32>
      %c0_14 = arith.constant 0 : index
      %c0_15 = arith.constant 0 : index
      %16 = vector.load %arg6[%c0_14, %c0_15] : memref<1x128xf32, #tpu.memory_space<vmem>>, vector<1x128xf32>
      %17 = vector.broadcast %16 : vector<1x128xf32> to vector<8x128xf32>
      %18 = arith.mulf %15, %17 : vector<8x128xf32>
      %c0_16 = arith.constant 0 : index
      %c0_17 = arith.constant 0 : index
      %19 = vector.load %arg7[%c0_16, %c0_17] : memref<8x128xf32, #tpu.memory_space<vmem>>, vector<8x128xf32>
      tpu.vector_store %arg7[%c0_16, %c0_17], %18 {strides = array<i32>} : memref<8x128xf32, #tpu.memory_space<vmem>>, vector<8x128xf32>,
    } else {
    }
    return
  }
  func.func @transform_0(%arg0: i32, %arg1: i32, %arg2: i32) -> (i32, i32) {
    %c0_i32 = arith.constant 0 : i32
    return %arg1, %arg2 : i32, i32
  }
  func.func @transform_1(%arg0: i32, %arg1: i32, %arg2: i32) -> (i32, i32) {
    %c0_i32 = arith.constant 0 : i32
    return %arg0, %arg2 : i32, i32
  }
  func.func @transform_2(%arg0: i32, %arg1: i32, %arg2: i32) -> (i32, i32) {
    %c0_i32 = arith.constant 0 : i32
    %c0_i32_0 = arith.constant 0 : i32
    return %arg1, %c0_i32 : i32, i32
  }
  func.func @transform_3(%arg0: i32, %arg1: i32, %arg2: i32) -> (i32, i32) {
    %c0_i32 = arith.constant 0 : i32
    %c0_i32_0 = arith.constant 0 : i32
    return %c0_i32, %arg0 : i32, i32
  }
  func.func @transform_4(%arg0: i32, %arg1: i32, %arg2: i32) -> (i32, i32) {
    %c0_i32 = arith.constant 0 : i32
    return %arg1, %arg0 : i32, i32
  }
}

</mosaic_0001>

<llo_original>
// kernel: tpu_custom_call.1
$region0: #{tpu_custom_call.1}
  #allocation0 [shape = 'u32[]', space=smem, size = 0x4, offset = 0x4, fixed_abs, tag = 'smem constant byte address 0x4 - core index']
  #allocation1 [shape = 'u32[144,128]{1,0:T(1,128)}', space=vmem, size = 0x12000, scoped, tag = 'internal scratch']
  #allocation2 [shape = 'f32[8,128]{1,0:T(8,128)}', space=vmem, size = 0x1000, scoped, tag = 'scratch operand']
  %s0 = inlined_call_operand.vmem [shape: f32[8,32], index: 0, kind: input, shape index: {}]
  %s1 = inlined_call_operand.vmem [shape: f32[128,32], index: 1, kind: input, shape index: {}]
  %s2 = inlined_call_operand.vmem [shape: f32[8,1], index: 2, kind: input, shape index: {}]
  %s3 = inlined_call_operand.vmem [shape: f32[1,128], index: 3, kind: input, shape index: {}]
  %s4 = inlined_call_operand.hbm [shape: f32[8,128], index: 4, kind: output, shape index: {}]
  %s5 = sld [smem:[#allocation0]]
  $region34: #{tpu_custom_call.1} parent=0
    _
  %s7 = ssub.s32 1, %s5
  %s8 = scalar_select 0, %s7, %s5
  $region1: #{tpu_custom_call.1} parent=0
    #allocation3 [shape = 'u8[4096]{0}', space=vmem, size = 0x1000, scoped, tag = 'output window, operand 0, single buffered']
    #allocation4 [shape = 's32[1]{0}', space=sflag, size = 0x4, scoped, tag = 'scoped memory for tpu_custom_call.1']
    %9 = vsyncpa [#allocation4], 0
    // Predicated region
    $region2: #{tpu_custom_call.1} parent=1 // pred_check
      _
    $region3: #{tpu_custom_call.1} parent=1 // pred_check_branch
      %11 = sbr.rel (0) target = $region5
    $region4: #{tpu_custom_call.1} parent=1 // pred_region
      _
    $region5: #{tpu_custom_call.1} parent=1 // pred_fallthru
      _
    // Predicated region
    $region6: #{tpu_custom_call.1} parent=1 // pred_check
      _
    $region7: #{tpu_custom_call.1} parent=1 // pred_check_branch
      %13 = sbr.rel (0) target = $region9
    $region8: #{tpu_custom_call.1} parent=1 // pred_region
      _
    $region9: #{tpu_custom_call.1} parent=1 // pred_fallthru
      _
    // Predicated region
    $region10: #{tpu_custom_call.1} parent=1 // pred_check
      _
    $region11: #{tpu_custom_call.1} parent=1 // pred_check_branch
      %15 = sbr.rel (0) target = $region13
    $region12: #{tpu_custom_call.1} parent=1 // pred_region
      _
    $region13: #{tpu_custom_call.1} parent=1 // pred_fallthru
      _
    // Predicated region
    $region14: #{tpu_custom_call.1} parent=1 // pred_check
      _
    $region15: #{tpu_custom_call.1} parent=1 // pred_check_branch
      %17 = sbr.rel (0) target = $region17
    $region16: #{tpu_custom_call.1} parent=1 // pred_region
      _
    $region17: #{tpu_custom_call.1} parent=1 // pred_fallthru
      _
    %p18 = scmp.eq.s32.totalorder 0, 0
    // Predicated region
    $region18: #{tpu_custom_call.1} parent=1 // pred_check
      %p19 = pneg %p18
    $region19: #{tpu_custom_call.1} parent=1 // pred_check_branch
      %21 = sbr.rel (%p19) target = $region21
    $region20: #{tpu_custom_call.1} parent=1 // pred_region
      %22 = vst [vmem:[#allocation2] sm:$0xff] 0.0
    $region21: #{tpu_custom_call.1} parent=1 // pred_fallthru
      _
    %v23 = vld [vmem:[#allocation2] sm:$0xff]
    %v24 = vld [vmem:[%s0] sm:$0xff]
    %v25 = vld [vmem:[%s1] sm:$0xff]
    %v26 = vld [vmem:[%s1 + $0x8] sm:$0xff]
    %v27 = vld [vmem:[%s1 + $0x10] sm:$0xff]
    %v28 = vld [vmem:[%s1 + $0x18] sm:$0xff]
    %v29 = vld [vmem:[%s1 + $0x20] sm:$0xff]
    %v30 = vld [vmem:[%s1 + $0x28] sm:$0xff]
    %v31 = vld [vmem:[%s1 + $0x30] sm:$0xff]
    %v32 = vld [vmem:[%s1 + $0x38] sm:$0xff]
    %v33 = vld [vmem:[%s1 + $0x40] sm:$0xff]
    %v34 = vld [vmem:[%s1 + $0x48] sm:$0xff]
    %v35 = vld [vmem:[%s1 + $0x50] sm:$0xff]
    %v36 = vld [vmem:[%s1 + $0x58] sm:$0xff]
    %v37 = vld [vmem:[%s1 + $0x60] sm:$0xff]
    %v38 = vld [vmem:[%s1 + $0x68] sm:$0xff]
    %v39 = vld [vmem:[%s1 + $0x70] sm:$0xff]
    %v40 = vld [vmem:[%s1 + $0x78] sm:$0xff]
    %vm41 = vcmask 261120
    %v43 = vsel %vm41, %v24, 0
    %v46 = vsel %vm41, %v25, 0
    %v49 = vsel %vm41, %v26, 0
    %v52 = vsel %vm41, %v27, 0
    %v55 = vsel %vm41, %v28, 0
    %v58 = vsel %vm41, %v29, 0
    %v61 = vsel %vm41, %v30, 0
    %v64 = vsel %vm41, %v31, 0
    %v67 = vsel %vm41, %v32, 0
    %v70 = vsel %vm41, %v33, 0
    %v73 = vsel %vm41, %v34, 0
    %v76 = vsel %vm41, %v35, 0
    %v79 = vsel %vm41, %v36, 0
    %v82 = vsel %vm41, %v37, 0
    %v85 = vsel %vm41, %v38, 0
    %v88 = vsel %vm41, %v39, 0
    %v91 = vsel %vm41, %v40, 0
    %93 = vmatprep.subr.mxu0 0.0
    %94 = vmatpush1.xpose.msra.mxu0 %v46
    %95 = vmatprep.subr.mxu0 0.0
    %96 = vmatpush1.xpose.msra.mxu0 %v49
    %97 = vmatprep.subr.mxu0 0.0
    %98 = vmatpush1.xpose.msra.mxu0 %v52
    %99 = vmatprep.subr.mxu0 0.0
    %100 = vmatpush1.xpose.msra.mxu0 %v55
    %101 = vmatprep.subr.mxu0 0.0
    %102 = vmatpush1.xpose.msra.mxu0 %v58
    %103 = vmatprep.subr.mxu0 0.0
    %104 = vmatpush1.xpose.msra.mxu0 %v61
    %105 = vmatprep.subr.mxu0 0.0
    %106 = vmatpush1.xpose.msra.mxu0 %v64
    %107 = vmatprep.subr.mxu0 0.0
    %108 = vmatpush1.xpose.msra.mxu0 %v67
    %109 = vmatprep.subr.mxu0 0.0
    %110 = vmatpush1.xpose.msra.mxu0 %v70
    %111 = vmatprep.subr.mxu0 0.0
    %112 = vmatpush1.xpose.msra.mxu0 %v73
    %113 = vmatprep.subr.mxu0 0.0
    %114 = vmatpush1.xpose.msra.mxu0 %v76
    %115 = vmatprep.subr.mxu0 0.0
    %116 = vmatpush1.xpose.msra.mxu0 %v79
    %117 = vmatprep.subr.mxu0 0.0
    %118 = vmatpush1.xpose.msra.mxu0 %v82
    %119 = vmatprep.subr.mxu0 0.0
    %120 = vmatpush1.xpose.msra.mxu0 %v85
    %121 = vmatprep.subr.mxu0 0.0
    %122 = vmatpush1.xpose.msra.mxu0 %v88
    %123 = vmatprep.subr.mxu0 0.0
    %124 = vmatpush1.xpose.msra.mxu0 %v91
    %125 = vmatprep.subr.mxu0 0.0
    %126 = vmatpush1.xpose.msra.mxu0 0.0
    %127 = vmatprep.subr.mxu0 0.0
    %128 = vmatpush1.xpose.msra.mxu0 0.0
    %129 = vmatprep.subr.mxu0 0.0
    %130 = vmatpush1.xpose.msra.mxu0 0.0
    %131 = vmatprep.subr.mxu0 0.0
    %132 = vmatpush1.xpose.msra.mxu0 0.0
    %133 = vmatprep.subr.mxu0 0.0
    %134 = vmatpush1.xpose.msra.mxu0 0.0
    %135 = vmatprep.subr.mxu0 0.0
    %136 = vmatpush1.xpose.msra.mxu0 0.0
    %137 = vmatprep.subr.mxu0 0.0
    %138 = vmatpush1.xpose.msra.mxu0 0.0
    %139 = vmatprep.subr.mxu0 0.0
    %140 = vmatpush1.xpose.msra.mxu0 0.0
    %141 = vmatprep.subr.mxu0 0.0
    %142 = vmatpush1.xpose.msra.mxu0 0.0
    %143 = vmatprep.subr.mxu0 0.0
    %144 = vmatpush1.xpose.msra.mxu0 0.0
    %145 = vmatprep.subr.mxu0 0.0
    %146 = vmatpush1.xpose.msra.mxu0 0.0
    %147 = vmatprep.subr.mxu0 0.0
    %148 = vmatpush1.xpose.msra.mxu0 0.0
    %149 = vmatprep.subr.mxu0 0.0
    %150 = vmatpush1.xpose.msra.mxu0 0.0
    %151 = vmatprep.subr.mxu0 0.0
    %152 = vmatpush1.xpose.msra.mxu0 0.0
    %153 = vmatprep.subr.mxu0 0.0
    %154 = vmatpush1.xpose.msra.mxu0 0.0
    %155 = vmatprep.subr.mxu0 0.0
    %156 = vmatpush1.xpose.msra.mxu0 0.0
    %157 = vmatprep.mubr.f32.mxu0 0.0
    %158 = vmatmul.mubr.f32.gmra.mrb[0].mxu0 %v43
    %v159 = vpop.f32.mrb[0].mxu0
    %v160 = vadd.f32 0.0, %v159
    %v161 = vpop.f32.mrb[0].mxu0
    %162 = vdwg.mxu0
    %v163 = vadd.f32 %v23, %v160
    %164 = vst [vmem:[#allocation2] sm:$0xff] %v163
    // Predicated region
    $region22: #{tpu_custom_call.1} parent=1 // pred_check
      %p165 = pneg %p18
    $region23: #{tpu_custom_call.1} parent=1 // pred_check_branch
      %167 = sbr.rel (%p165) target = $region25
    $region24: #{tpu_custom_call.1} parent=1 // pred_region
      %v168 = vld [vmem:[#allocation2] sm:$0xff]
      %v169 = vld [vmem:[%s2] sm:$0xff]
      %171 = vset.pattern.permute.xlu0 0
      %172 = vperm.xlu0 %171, %v169
      %v173 = vpop.permute.xlu0 %172
      %v175 = vmul.f32 %v168, %v173
      %v176 = vld [vmem:[%s3] sm:$0x1]
      %v178 = vlaneseq
      %v179 = vshrl.u32 %v178, 7
      %v180 = vsub.s32 0, %v179
      %v181 = vrot.slane %v176, %v180
      %v183 = vmul.f32 %v175, %v181
      %184 = vst [vmem:[#allocation3] sm:$0xff] %v183
    $region25: #{tpu_custom_call.1} parent=1 // pred_fallthru
      _
    // Predicated region
    $region26: #{tpu_custom_call.1} parent=1 // pred_check
      _
    $region27: #{tpu_custom_call.1} parent=1 // pred_check_branch
      %186 = sbr.rel (0) target = $region29
    $region28: #{tpu_custom_call.1} parent=1 // pred_region
      %s188 = ssub.s32 128, 128
      %189 = vsyncadd [#allocation4], %s188
      %s191 = sshll.u32 [#allocation3], 4
      %s192 = int_to_ptr.vmem [resolvable:$true] %s191
      %194 = dma.vmem_to_hbm [thread:$0]  %s192, 128, %s4, [#allocation4]
    $region29: #{tpu_custom_call.1} parent=1 // pred_fallthru
      _
    // Predicated region
    $region30: #{tpu_custom_call.1} parent=1 // pred_check
      _
    $region31: #{tpu_custom_call.1} parent=1 // pred_check_branch
      %196 = sbr.rel (0) target = $region33
    $region32: #{tpu_custom_call.1} parent=1 // pred_region
      %197 = dma.done [#allocation4], 128
    $region33: #{tpu_custom_call.1} parent=1 // pred_fallthru
      _
    %198 = vsyncpa [#allocation4], 1

</llo_original>
